<compile_context>
chip_gen: v6e
topology: v6e:2x2x1
jax: 0.10.0
libtpu: 0.0.40
codegen_flags: <defaults>
</compile_context>

<pallas_src>
import math

import jax
import jax.numpy as jnp
from jax.experimental import pallas as pl
from jax.experimental.pallas import tpu as pltpu


def _round_up(x, m):
    return (x + m - 1) // m * m


def _pick_tt(T, pref=4):
    tt = max(1, min(pref, T))
    while T % tt:
        tt -= 1
    return tt


# ---------------------------------------------------------------------------
# Kernel 1: batched matmul + bias (parallel grid). Used for the per-layer
# input projections over all T time steps and for the final vocab projection.
# ---------------------------------------------------------------------------
def _matmul_bias_kernel(x_ref, w_ref, b_ref, o_ref, acc_ref):
    k = pl.program_id(2)

    @pl.when(k == 0)
    def _():
        acc_ref[...] = jnp.zeros_like(acc_ref)

    # bf16 x bf16 -> f32 accumulate: single MXU pass.
    acc_ref[...] += jnp.dot(x_ref[...].astype(w_ref.dtype), w_ref[...],
                            preferred_element_type=jnp.float32)

    @pl.when(k == pl.num_programs(2) - 1)
    def _():
        o_ref[...] = (acc_ref[...] + b_ref[...]).astype(o_ref.dtype)


def matmul_bias(x, w, b, out_dtype=jnp.float32):
    """x: (M, K) f32, w: (K, N) bf16 (pre-transposed & padded), b: (1, N) f32."""
    M, K = x.shape
    K2, N = w.shape
    assert K == K2 and b.shape == (1, N)
    tm = min(256, _round_up(M, 8))
    M_p = _round_up(M, tm)
    tn = 256 if N % 256 == 0 else 128
    tk = 256 if K % 256 == 0 else 128
    if M_p != M:
        x = jnp.pad(x, ((0, M_p - M), (0, 0)))

    out = pl.pallas_call(
        _matmul_bias_kernel,
        out_shape=jax.ShapeDtypeStruct((M_p, N), out_dtype),
        grid_spec=pltpu.PrefetchScalarGridSpec(
            num_scalar_prefetch=0,
            grid=(M_p // tm, N // tn, K // tk),
            in_specs=[
                pl.BlockSpec((tm, tk), lambda i, j, k: (i, k)),
                pl.BlockSpec((tk, tn), lambda i, j, k: (k, j)),
                pl.BlockSpec((1, tn), lambda i, j, k: (0, j)),
            ],
            out_specs=pl.BlockSpec((tm, tn), lambda i, j, k: (i, j)),
            scratch_shapes=[pltpu.VMEM((tm, tn), jnp.float32)],
        ),
        compiler_params=pltpu.CompilerParams(
            dimension_semantics=("parallel", "parallel", "arbitrary")),
    )(x, w, b)
    return out[:M] if M_p != M else out


# ---------------------------------------------------------------------------
# Kernel 2: the recurrence  h_t = tanh(xproj_t + h_{t-1} @ Wh^T), one layer.
# Grid iterates serially over blocks of TT time steps; Wh^T and h0 stay
# resident (constant index_map); the carry lives in a small VMEM scratch.
# ---------------------------------------------------------------------------
def _make_recurrence_kernel(tt):
    def kernel(xproj_ref, wh_ref, h0_ref, hout_ref, h_carry):
        @pl.when(pl.program_id(0) == 0)
        def _():
            h_carry[...] = h0_ref[...]

        wh = wh_ref[...]                      # (H_p, H_p) bf16, VMEM resident
        h = h_carry[...]                      # (B_p, H_p) f32
        for i in range(tt):                   # static unroll over TT steps
            a = xproj_ref[i] + jnp.dot(h.astype(wh.dtype), wh,
                                       preferred_element_type=jnp.float32)
            h = jnp.tanh(a)
            hout_ref[i] = h
        h_carry[...] = h

    return kernel


def rnn_recurrence(xproj, wh_t, h0, tt):
    """xproj: (T, B_p, H_p) f32, wh_t: (H_p, H_p) bf16, h0: (B_p, H_p) f32."""
    T, B_p, H_p = xproj.shape
    assert T % tt == 0
    return pl.pallas_call(
        _make_recurrence_kernel(tt),
        out_shape=jax.ShapeDtypeStruct((T, B_p, H_p), jnp.float32),
        grid_spec=pltpu.PrefetchScalarGridSpec(
            num_scalar_prefetch=0,
            grid=(T // tt,),
            in_specs=[
                pl.BlockSpec((tt, B_p, H_p), lambda s: (s, 0, 0)),  # xproj[t:t+tt]
                pl.BlockSpec((H_p, H_p), lambda s: (0, 0)),         # resident Wh^T
                pl.BlockSpec((B_p, H_p), lambda s: (0, 0)),         # resident h0
            ],
            out_specs=pl.BlockSpec((tt, B_p, H_p), lambda s: (s, 0, 0)),
            scratch_shapes=[pltpu.VMEM((B_p, H_p), jnp.float32)],
        ),
        compiler_params=pltpu.CompilerParams(
            dimension_semantics=("arbitrary",)),   # true recurrence: serial in t
    )(xproj, wh_t, h0)


# ---------------------------------------------------------------------------
# One-time parameter prep: transpose, zero-pad to (x128) feature dims, bf16.
# ---------------------------------------------------------------------------
def prepare_params(emb_table, layer_wx, layer_wh, layer_bh, v_w, v_b,
                   weight_dtype=jnp.bfloat16):
    V, E = emb_table.shape
    H = layer_wh[0].shape[0]
    E_p, H_p, V_p = _round_up(E, 128), _round_up(H, 128), _round_up(V, 128)

    emb_p = jnp.pad(emb_table, ((0, 0), (0, E_p - E)))      # activations: f32

    wx_t, wh_t, bias = [], [], []
    for l, (wx, wh, bh) in enumerate(zip(layer_wx, layer_wh, layer_bh)):
        in_sz = wx.shape[1]
        in_p = E_p if l == 0 else H_p
        wx_t.append(jnp.pad(wx.T, ((0, in_p - in_sz), (0, H_p - H)))
                    .astype(weight_dtype))                  # (in_p, H_p)
        wh_t.append(jnp.pad(wh.T, ((0, H_p - H), (0, H_p - H)))
                    .astype(weight_dtype))                  # (H_p, H_p)
        bias.append(jnp.pad(bh, (0, H_p - H)).reshape(1, H_p))

    wv_t = jnp.pad(v_w.T, ((0, H_p - H), (0, V_p - V))).astype(weight_dtype)
    bv = jnp.pad(v_b, (0, V_p - V)).reshape(1, V_p)

    return dict(emb=emb_p, wx=wx_t, wh=wh_t, b=bias, wv=wv_t, bv=bv,
                dims=(E, H, V, E_p, H_p, V_p))


def rnn_forward(prepared, token_ids, hidden, tt_pref=4):
    """token_ids: (T, B) int32; hidden: (L, B, H) f32.
    Returns (logits (T, B, V) f32, final hidden (L, B, H) f32)."""
    E, H, V, E_p, H_p, V_p = prepared["dims"]
    T, B = token_ids.shape
    L = hidden.shape[0]
    B_p = _round_up(B, 8)
    tt = _pick_tt(T, tt_pref)

    # Embedding lookup (vocab gather) stays in plain JAX.
    emb = jnp.take(prepared["emb"], token_ids, axis=0)            # (T, B, E_p)
    if B_p != B:
        emb = jnp.pad(emb, ((0, 0), (0, B_p - B), (0, 0)))
    h0 = jnp.pad(hidden, ((0, 0), (0, B_p - B), (0, H_p - H)))    # (L, B_p, H_p)

    x = emb.reshape(T * B_p, E_p)
    h_finals = []
    for l in range(L):
        # Batched (non-recurrent) input projection over ALL time steps.
        xproj = matmul_bias(x, prepared["wx"][l], prepared["b"][l])
        xproj = xproj.reshape(T, B_p, H_p)
        # Serial recurrence over time for this layer only.
        h_all = rnn_recurrence(xproj, prepared["wh"][l], h0[l], tt)
        h_finals.append(h_all[T - 1])
        x = h_all.reshape(T * B_p, H_p)

    # Vocab projection deferred to one big batched matmul over T*B rows.
    logits = matmul_bias(x, prepared["wv"], prepared["bv"])
    logits = logits.reshape(T, B_p, V_p)[:, :B, :V]
    h_final = jnp.stack(h_finals)[:, :B, :H]
    return logits, h_final


# ---------------------------------------------------------------------------
# Pure-JAX f32 reference (mirror of the PyTorch forward, dropout = identity).
# ---------------------------------------------------------------------------
def reference_forward(emb_table, layer_wx, layer_wh, layer_bh, v_w, v_b,
                      token_ids, hidden):
    T = token_ids.shape[0]
    L = len(layer_wx)
    emb = jnp.take(emb_table, token_ids, axis=0)
    h = [hidden[l] for l in range(L)]
    logits = []
    for t in range(T):
        x = emb[t]
        for l in range(L):
            a = (jnp.dot(h[l], layer_wh[l].T, precision=jax.lax.Precision.HIGHEST)
                 + layer_bh[l]
                 + jnp.dot(x, layer_wx[l].T, precision=jax.lax.Precision.HIGHEST))
            h[l] = jnp.tanh(a)
            x = h[l]
        logits.append(jnp.dot(x, v_w.T, precision=jax.lax.Precision.HIGHEST) + v_b)
    return jnp.stack(logits), jnp.stack(h)


if __name__ == "__main__":
    # Small but lane-dense shapes (feature dims multiples of 128, batch of 8).
    T, B, E, H, V, L = 8, 8, 128, 128, 256, 2

    keys = jax.random.split(jax.random.PRNGKey(0), 16)
    emb_table = jax.random.uniform(keys[0], (V, E), minval=-0.1, maxval=0.1,
                                   dtype=jnp.float32)
    v_w = jax.random.uniform(keys[1], (V, H), minval=-0.1, maxval=0.1,
                             dtype=jnp.float32)
    v_b = jnp.zeros((V,), jnp.float32)

    k = 1.0 / math.sqrt(H)
    layer_wx, layer_wh, layer_bh = [], [], []
    for l in range(L):
        in_sz = E if l == 0 else H
        layer_wx.append(jax.random.uniform(keys[2 + 3 * l], (H, in_sz),
                                           minval=-k, maxval=k, dtype=jnp.float32))
        layer_wh.append(jax.random.uniform(keys[3 + 3 * l], (H, H),
                                           minval=-k, maxval=k, dtype=jnp.float32))
        layer_bh.append(jax.random.uniform(keys[4 + 3 * l], (H,),
                                           minval=-k, maxval=k, dtype=jnp.float32))

    token_ids = jax.random.randint(keys[10], (T, B), 0, V, dtype=jnp.int32)
    hidden0 = jax.random.uniform(keys[11], (L, B, H), minval=-1.0, maxval=1.0,
                                 dtype=jnp.float32)

    # One-time parameter prep (transpose + pad + bf16), then the jitted forward.
    prepared = prepare_params(emb_table, layer_wx, layer_wh, layer_bh, v_w, v_b)
    fwd = jax.jit(lambda ids, h: rnn_forward(prepared, ids, h))

    logits, h_final = fwd(token_ids, hidden0)
    logits, h_final = jax.block_until_ready((logits, h_final))

    ref_logits, ref_h = reference_forward(emb_table, layer_wx, layer_wh, layer_bh,
                                          v_w, v_b, token_ids, hidden0)

    assert logits.shape == (T, B, V)
    assert h_final.shape == (L, B, H)
    # bf16 single-pass MXU weights vs f32 HIGHEST reference -> loose tolerance.
    assert jnp.allclose(logits, ref_logits, atol=5e-2, rtol=5e-2)
    assert jnp.allclose(h_final, ref_h, atol=5e-2, rtol=5e-2)

    print("KERNEL_OK")
</pallas_src>

<mosaic_0001>
module attributes {stable_mosaic.version = 11 : i64} {
  func.func @_matmul_bias_kernel(%arg0: i32, %arg1: i32, %arg2: i32, %arg3: memref<64x128xf32, #tpu.memory_space<vmem>>, %arg4: memref<128x128xbf16, #tpu.memory_space<vmem>>, %arg5: memref<1x128xf32, #tpu.memory_space<vmem>>, %arg6: memref<64x128xf32, #tpu.memory_space<vmem>>, %arg7: memref<64x128xf32, #tpu.memory_space<vmem>>) attributes {dimension_semantics = [#tpu.dimension_semantics<parallel>, #tpu.dimension_semantics<parallel>, #tpu.dimension_semantics<arbitrary>], iteration_bounds = array<i64: 1, 1, 1>, scalar_prefetch = 0 : i64, scratch_operands = 1 : i64, tpu.core_type = #tpu.core_type<tc>, window_params = [{transform_indices = @transform_0, window_bounds = array<i64: 64, 128>}, {transform_indices = @transform_1, window_bounds = array<i64: 128, 128>}, {transform_indices = @transform_2, window_bounds = array<i64: 1, 128>}, {transform_indices = @transform_3, window_bounds = array<i64: 64, 128>}]} {
    %c0_i32 = arith.constant 0 : i32
    %0 = arith.cmpi eq, %arg2, %c0_i32 : i32
    %1 = arith.extui %0 : i1 to i32
    %c0_i32_0 = arith.constant 0 : i32
    %2 = arith.cmpi ne, %1, %c0_i32_0 : i32
    scf.if %2 {
      %cst_10 = arith.constant 0.000000e+00 : f32
      %13 = vector.broadcast %cst_10 : f32 to vector<64x128xf32>
      %c0_11 = arith.constant 0 : index
      %c0_12 = arith.constant 0 : index
      %14 = vector.load %arg7[%c0_11, %c0_12] : memref<64x128xf32, #tpu.memory_space<vmem>>, vector<64x128xf32>
      tpu.vector_store %arg7[%c0_11, %c0_12], %13 {strides = array<i32>} : memref<64x128xf32, #tpu.memory_space<vmem>>, vector<64x128xf32>,
    } else {
    }
    %c0 = arith.constant 0 : index
    %c0_1 = arith.constant 0 : index
    %3 = vector.load %arg7[%c0, %c0_1] : memref<64x128xf32, #tpu.memory_space<vmem>>, vector<64x128xf32>
    %c0_2 = arith.constant 0 : index
    %c0_3 = arith.constant 0 : index
    %4 = vector.load %arg3[%c0_2, %c0_3] : memref<64x128xf32, #tpu.memory_space<vmem>>, vector<64x128xf32>
    %5 = arith.truncf %4 : vector<64x128xf32> to vector<64x128xbf16>
    %c0_4 = arith.constant 0 : index
    %c0_5 = arith.constant 0 : index
    %6 = vector.load %arg4[%c0_4, %c0_5] : memref<128x128xbf16, #tpu.memory_space<vmem>>, vector<128x128xbf16>
    %cst = arith.constant dense<0.000000e+00> : vector<64x128xf32>
    %7 = tpu.matmul %5, %6, %cst {dimension_numbers = #tpu.dot_dimension_numbers<[1], [0], [0], [1], [0, 0, 1, 1], [], []>} : vector<64x128xbf16>, vector<128x128xbf16>, vector<64x128xf32> -> vector<64x128xf32>
    %8 = arith.addf %3, %7 : vector<64x128xf32>
    %c0_6 = arith.constant 0 : index
    %c0_7 = arith.constant 0 : index
    %9 = vector.load %arg7[%c0_6, %c0_7] : memref<64x128xf32, #tpu.memory_space<vmem>>, vector<64x128xf32>
    tpu.vector_store %arg7[%c0_6, %c0_7], %8 {strides = array<i32>} : memref<64x128xf32, #tpu.memory_space<vmem>>, vector<64x128xf32>,
    %c0_i32_8 = arith.constant 0 : i32
    %10 = arith.cmpi eq, %arg2, %c0_i32_8 : i32
    %11 = arith.extui %10 : i1 to i32
    %c0_i32_9 = arith.constant 0 : i32
    %12 = arith.cmpi ne, %11, %c0_i32_9 : i32
    scf.if %12 {
      %c0_10 = arith.constant 0 : index
      %c0_11 = arith.constant 0 : index
      %13 = vector.load %arg7[%c0_10, %c0_11] : memref<64x128xf32, #tpu.memory_space<vmem>>, vector<64x128xf32>
      %c0_12 = arith.constant 0 : index
      %c0_13 = arith.constant 0 : index
      %14 = vector.load %arg5[%c0_12, %c0_13] : memref<1x128xf32, #tpu.memory_space<vmem>>, vector<1x128xf32>
      %15 = vector.broadcast %14 : vector<1x128xf32> to vector<64x128xf32>
      %16 = arith.addf %13, %15 : vector<64x128xf32>
      %c0_14 = arith.constant 0 : index
      %c0_15 = arith.constant 0 : index
      %17 = vector.load %arg6[%c0_14, %c0_15] : memref<64x128xf32, #tpu.memory_space<vmem>>, vector<64x128xf32>
      tpu.vector_store %arg6[%c0_14, %c0_15], %16 {strides = array<i32>} : memref<64x128xf32, #tpu.memory_space<vmem>>, vector<64x128xf32>,
    } else {
    }
    return
  }
  func.func @transform_0(%arg0: i32, %arg1: i32, %arg2: i32) -> (i32, i32) {
    %c0_i32 = arith.constant 0 : i32
    return %arg0, %arg2 : i32, i32
  }
  func.func @transform_1(%arg0: i32, %arg1: i32, %arg2: i32) -> (i32, i32) {
    %c0_i32 = arith.constant 0 : i32
    return %arg2, %arg1 : i32, i32
  }
  func.func @transform_2(%arg0: i32, %arg1: i32, %arg2: i32) -> (i32, i32) {
    %c0_i32 = arith.constant 0 : i32
    %c0_i32_0 = arith.constant 0 : i32
    return %c0_i32, %arg1 : i32, i32
  }
  func.func @transform_3(%arg0: i32, %arg1: i32, %arg2: i32) -> (i32, i32) {
    %c0_i32 = arith.constant 0 : i32
    return %arg0, %arg1 : i32, i32
  }
}

module attributes {stable_mosaic.version = 11 : i64} {
  func.func @kernel(%arg0: i32, %arg1: memref<4x8x128xf32, #tpu.memory_space<vmem>>, %arg2: memref<128x128xbf16, #tpu.memory_space<vmem>>, %arg3: memref<8x128xf32, #tpu.memory_space<vmem>>, %arg4: memref<4x8x128xf32, #tpu.memory_space<vmem>>, %arg5: memref<8x128xf32, #tpu.memory_space<vmem>>) attributes {dimension_semantics = [#tpu.dimension_semantics<arbitrary>], iteration_bounds = array<i64: 2>, scalar_prefetch = 0 : i64, scratch_operands = 1 : i64, tpu.core_type = #tpu.core_type<tc>, window_params = [{transform_indices = @transform_0, window_bounds = array<i64: 4, 8, 128>}, {pipeline_mode = #tpu.pipeline_mode<synchronous>, transform_indices = @transform_1, window_bounds = array<i64: 128, 128>}, {pipeline_mode = #tpu.pipeline_mode<synchronous>, transform_indices = @transform_2, window_bounds = array<i64: 8, 128>}, {transform_indices = @transform_3, window_bounds = array<i64: 4, 8, 128>}]} {
    %c0_i32 = arith.constant 0 : i32
    %0 = arith.cmpi eq, %arg0, %c0_i32 : i32
    %1 = arith.extui %0 : i1 to i32
    %c0_i32_0 = arith.constant 0 : i32
    %2 = arith.cmpi ne, %1, %c0_i32_0 : i32
    scf.if %2 {
      %c0_30 = arith.constant 0 : index
      %c0_31 = arith.constant 0 : index
      %42 = vector.load %arg3[%c0_30, %c0_31] : memref<8x128xf32, #tpu.memory_space<vmem>>, vector<8x128xf32>
      %c0_32 = arith.constant 0 : index
      %c0_33 = arith.constant 0 : index
      %43 = vector.load %arg5[%c0_32, %c0_33] : memref<8x128xf32, #tpu.memory_space<vmem>>, vector<8x128xf32>
      tpu.vector_store %arg5[%c0_32, %c0_33], %42 {strides = array<i32>} : memref<8x128xf32, #tpu.memory_space<vmem>>, vector<8x128xf32>,
    } else {
    }
    %c0 = arith.constant 0 : index
    %c0_1 = arith.constant 0 : index
    %3 = vector.load %arg2[%c0, %c0_1] : memref<128x128xbf16, #tpu.memory_space<vmem>>, vector<128x128xbf16>
    %c0_2 = arith.constant 0 : index
    %c0_3 = arith.constant 0 : index
    %4 = vector.load %arg5[%c0_2, %c0_3] : memref<8x128xf32, #tpu.memory_space<vmem>>, vector<8x128xf32>
    %c0_4 = arith.constant 0 : index
    %c0_5 = arith.constant 0 : index
    %c0_6 = arith.constant 0 : index
    %5 = vector.load %arg1[%c0_4, %c0_5, %c0_6] : memref<4x8x128xf32, #tpu.memory_space<vmem>>, vector<1x8x128xf32>
    %6 = vector.shape_cast %5 : vector<1x8x128xf32> to vector<8x128xf32>
    %7 = arith.truncf %4 : vector<8x128xf32> to vector<8x128xbf16>
    %cst = arith.constant dense<0.000000e+00> : vector<8x128xf32>
    %8 = tpu.matmul %7, %3, %cst {dimension_numbers = #tpu.dot_dimension_numbers<[1], [0], [0], [1], [0, 0, 1, 1], [], []>} : vector<8x128xbf16>, vector<128x128xbf16>, vector<8x128xf32> -> vector<8x128xf32>
    %9 = arith.addf %6, %8 : vector<8x128xf32>
    %10 = math.tanh %9 : vector<8x128xf32>
    %c0_7 = arith.constant 0 : index
    %c0_8 = arith.constant 0 : index
    %c0_9 = arith.constant 0 : index
    %11 = vector.load %arg4[%c0_7, %c0_8, %c0_9] : memref<4x8x128xf32, #tpu.memory_space<vmem>>, vector<1x8x128xf32>
    %12 = vector.shape_cast %11 : vector<1x8x128xf32> to vector<8x128xf32>
    %13 = vector.shape_cast %10 : vector<8x128xf32> to vector<1x8x128xf32>
    tpu.vector_store %arg4[%c0_7, %c0_8, %c0_9], %13 {strides = array<i32>} : memref<4x8x128xf32, #tpu.memory_space<vmem>>, vector<1x8x128xf32>,
    %c1 = arith.constant 1 : index
    %c0_10 = arith.constant 0 : index
    %c0_11 = arith.constant 0 : index
    %14 = vector.load %arg1[%c1, %c0_10, %c0_11] : memref<4x8x128xf32, #tpu.memory_space<vmem>>, vector<1x8x128xf32>
    %15 = vector.shape_cast %14 : vector<1x8x128xf32> to vector<8x128xf32>
    %16 = arith.truncf %10 : vector<8x128xf32> to vector<8x128xbf16>
    %cst_12 = arith.constant dense<0.000000e+00> : vector<8x128xf32>
    %17 = tpu.matmul %16, %3, %cst_12 {dimension_numbers = #tpu.dot_dimension_numbers<[1], [0], [0], [1], [0, 0, 1, 1], [], []>} : vector<8x128xbf16>, vector<128x128xbf16>, vector<8x128xf32> -> vector<8x128xf32>
    %18 = arith.addf %15, %17 : vector<8x128xf32>
    %19 = math.tanh %18 : vector<8x128xf32>
    %c1_13 = arith.constant 1 : index
    %c0_14 = arith.constant 0 : index
    %c0_15 = arith.constant 0 : index
    %20 = vector.load %arg4[%c1_13, %c0_14, %c0_15] : memref<4x8x128xf32, #tpu.memory_space<vmem>>, vector<1x8x128xf32>
    %21 = vector.shape_cast %20 : vector<1x8x128xf32> to vector<8x128xf32>
    %22 = vector.shape_cast %19 : vector<8x128xf32> to vector<1x8x128xf32>
    tpu.vector_store %arg4[%c1_13, %c0_14, %c0_15], %22 {strides = array<i32>} : memref<4x8x128xf32, #tpu.memory_space<vmem>>, vector<1x8x128xf32>,
    %c2 = arith.constant 2 : index
    %c0_16 = arith.constant 0 : index
    %c0_17 = arith.constant 0 : index
    %23 = vector.load %arg1[%c2, %c0_16, %c0_17] : memref<4x8x128xf32, #tpu.memory_space<vmem>>, vector<1x8x128xf32>
    %24 = vector.shape_cast %23 : vector<1x8x128xf32> to vector<8x128xf32>
    %25 = arith.truncf %19 : vector<8x128xf32> to vector<8x128xbf16>
    %cst_18 = arith.constant dense<0.000000e+00> : vector<8x128xf32>
    %26 = tpu.matmul %25, %3, %cst_18 {dimension_numbers = #tpu.dot_dimension_numbers<[1], [0], [0], [1], [0, 0, 1, 1], [], []>} : vector<8x128xbf16>, vector<128x128xbf16>, vector<8x128xf32> -> vector<8x128xf32>
    %27 = arith.addf %24, %26 : vector<8x128xf32>
    %28 = math.tanh %27 : vector<8x128xf32>
    %c2_19 = arith.constant 2 : index
    %c0_20 = arith.constant 0 : index
    %c0_21 = arith.constant 0 : index
    %29 = vector.load %arg4[%c2_19, %c0_20, %c0_21] : memref<4x8x128xf32, #tpu.memory_space<vmem>>, vector<1x8x128xf32>
    %30 = vector.shape_cast %29 : vector<1x8x128xf32> to vector<8x128xf32>
    %31 = vector.shape_cast %28 : vector<8x128xf32> to vector<1x8x128xf32>
    tpu.vector_store %arg4[%c2_19, %c0_20, %c0_21], %31 {strides = array<i32>} : memref<4x8x128xf32, #tpu.memory_space<vmem>>, vector<1x8x128xf32>,
    %c3 = arith.constant 3 : index
    %c0_22 = arith.constant 0 : index
    %c0_23 = arith.constant 0 : index
    %32 = vector.load %arg1[%c3, %c0_22, %c0_23] : memref<4x8x128xf32, #tpu.memory_space<vmem>>, vector<1x8x128xf32>
    %33 = vector.shape_cast %32 : vector<1x8x128xf32> to vector<8x128xf32>
    %34 = arith.truncf %28 : vector<8x128xf32> to vector<8x128xbf16>
    %cst_24 = arith.constant dense<0.000000e+00> : vector<8x128xf32>
    %35 = tpu.matmul %34, %3, %cst_24 {dimension_numbers = #tpu.dot_dimension_numbers<[1], [0], [0], [1], [0, 0, 1, 1], [], []>} : vector<8x128xbf16>, vector<128x128xbf16>, vector<8x128xf32> -> vector<8x128xf32>
    %36 = arith.addf %33, %35 : vector<8x128xf32>
    %37 = math.tanh %36 : vector<8x128xf32>
    %c3_25 = arith.constant 3 : index
    %c0_26 = arith.constant 0 : index
    %c0_27 = arith.constant 0 : index
    %38 = vector.load %arg4[%c3_25, %c0_26, %c0_27] : memref<4x8x128xf32, #tpu.memory_space<vmem>>, vector<1x8x128xf32>
    %39 = vector.shape_cast %38 : vector<1x8x128xf32> to vector<8x128xf32>
    %40 = vector.shape_cast %37 : vector<8x128xf32> to vector<1x8x128xf32>
    tpu.vector_store %arg4[%c3_25, %c0_26, %c0_27], %40 {strides = array<i32>} : memref<4x8x128xf32, #tpu.memory_space<vmem>>, vector<1x8x128xf32>,
    %c0_28 = arith.constant 0 : index
    %c0_29 = arith.constant 0 : index
    %41 = vector.load %arg5[%c0_28, %c0_29] : memref<8x128xf32, #tpu.memory_space<vmem>>, vector<8x128xf32>
    tpu.vector_store %arg5[%c0_28, %c0_29], %37 {strides = array<i32>} : memref<8x128xf32, #tpu.memory_space<vmem>>, vector<8x128xf32>,
    return
  }
  func.func @transform_0(%arg0: i32) -> (i32, i32, i32) {
    %c0_i32 = arith.constant 0 : i32
    %c0_i32_0 = arith.constant 0 : i32
    %c0_i32_1 = arith.constant 0 : i32
    return %arg0, %c0_i32, %c0_i32_0 : i32, i32, i32
  }
  func.func @transform_1(%arg0: i32) -> (i32, i32) {
    %c0_i32 = arith.constant 0 : i32
    %c0_i32_0 = arith.constant 0 : i32
    %c0_i32_1 = arith.constant 0 : i32
    return %c0_i32, %c0_i32_0 : i32, i32
  }
  func.func @transform_2(%arg0: i32) -> (i32, i32) {
    %c0_i32 = arith.constant 0 : i32
    %c0_i32_0 = arith.constant 0 : i32
    %c0_i32_1 = arith.constant 0 : i32
    return %c0_i32, %c0_i32_0 : i32, i32
  }
  func.func @transform_3(%arg0: i32) -> (i32, i32, i32) {
    %c0_i32 = arith.constant 0 : i32
    %c0_i32_0 = arith.constant 0 : i32
    %c0_i32_1 = arith.constant 0 : i32
    return %arg0, %c0_i32, %c0_i32_0 : i32, i32, i32
  }
}

module attributes {stable_mosaic.version = 11 : i64} {
  func.func @_matmul_bias_kernel(%arg0: i32, %arg1: i32, %arg2: i32, %arg3: memref<64x128xf32, #tpu.memory_space<vmem>>, %arg4: memref<128x256xbf16, #tpu.memory_space<vmem>>, %arg5: memref<1x256xf32, #tpu.memory_space<vmem>>, %arg6: memref<64x256xf32, #tpu.memory_space<vmem>>, %arg7: memref<64x256xf32, #tpu.memory_space<vmem>>) attributes {dimension_semantics = [#tpu.dimension_semantics<parallel>, #tpu.dimension_semantics<parallel>, #tpu.dimension_semantics<arbitrary>], iteration_bounds = array<i64: 1, 1, 1>, scalar_prefetch = 0 : i64, scratch_operands = 1 : i64, tpu.core_type = #tpu.core_type<tc>, window_params = [{transform_indices = @transform_0, window_bounds = array<i64: 64, 128>}, {transform_indices = @transform_1, window_bounds = array<i64: 128, 256>}, {transform_indices = @transform_2, window_bounds = array<i64: 1, 256>}, {transform_indices = @transform_3, window_bounds = array<i64: 64, 256>}]} {
    %c0_i32 = arith.constant 0 : i32
    %0 = arith.cmpi eq, %arg2, %c0_i32 : i32
    %1 = arith.extui %0 : i1 to i32
    %c0_i32_0 = arith.constant 0 : i32
    %2 = arith.cmpi ne, %1, %c0_i32_0 : i32
    scf.if %2 {
      %cst_10 = arith.constant 0.000000e+00 : f32
      %13 = vector.broadcast %cst_10 : f32 to vector<64x256xf32>
      %c0_11 = arith.constant 0 : index
      %c0_12 = arith.constant 0 : index
      %14 = vector.load %arg7[%c0_11, %c0_12] : memref<64x256xf32, #tpu.memory_space<vmem>>, vector<64x256xf32>
      tpu.vector_store %arg7[%c0_11, %c0_12], %13 {strides = array<i32>} : memref<64x256xf32, #tpu.memory_space<vmem>>, vector<64x256xf32>,
    } else {
    }
    %c0 = arith.constant 0 : index
    %c0_1 = arith.constant 0 : index
    %3 = vector.load %arg7[%c0, %c0_1] : memref<64x256xf32, #tpu.memory_space<vmem>>, vector<64x256xf32>
    %c0_2 = arith.constant 0 : index
    %c0_3 = arith.constant 0 : index
    %4 = vector.load %arg3[%c0_2, %c0_3] : memref<64x128xf32, #tpu.memory_space<vmem>>, vector<64x128xf32>
    %5 = arith.truncf %4 : vector<64x128xf32> to vector<64x128xbf16>
    %c0_4 = arith.constant 0 : index
    %c0_5 = arith.constant 0 : index
    %6 = vector.load %arg4[%c0_4, %c0_5] : memref<128x256xbf16, #tpu.memory_space<vmem>>, vector<128x256xbf16>
    %cst = arith.constant dense<0.000000e+00> : vector<64x256xf32>
    %7 = tpu.matmul %5, %6, %cst {dimension_numbers = #tpu.dot_dimension_numbers<[1], [0], [0], [1], [0, 0, 1, 1], [], []>} : vector<64x128xbf16>, vector<128x256xbf16>, vector<64x256xf32> -> vector<64x256xf32>
    %8 = arith.addf %3, %7 : vector<64x256xf32>
    %c0_6 = arith.constant 0 : index
    %c0_7 = arith.constant 0 : index
    %9 = vector.load %arg7[%c0_6, %c0_7] : memref<64x256xf32, #tpu.memory_space<vmem>>, vector<64x256xf32>
    tpu.vector_store %arg7[%c0_6, %c0_7], %8 {strides = array<i32>} : memref<64x256xf32, #tpu.memory_space<vmem>>, vector<64x256xf32>,
    %c0_i32_8 = arith.constant 0 : i32
    %10 = arith.cmpi eq, %arg2, %c0_i32_8 : i32
    %11 = arith.extui %10 : i1 to i32
    %c0_i32_9 = arith.constant 0 : i32
    %12 = arith.cmpi ne, %11, %c0_i32_9 : i32
    scf.if %12 {
      %c0_10 = arith.constant 0 : index
      %c0_11 = arith.constant 0 : index
      %13 = vector.load %arg7[%c0_10, %c0_11] : memref<64x256xf32, #tpu.memory_space<vmem>>, vector<64x256xf32>
      %c0_12 = arith.constant 0 : index
      %c0_13 = arith.constant 0 : index
      %14 = vector.load %arg5[%c0_12, %c0_13] : memref<1x256xf32, #tpu.memory_space<vmem>>, vector<1x256xf32>
      %15 = vector.broadcast %14 : vector<1x256xf32> to vector<64x256xf32>
      %16 = arith.addf %13, %15 : vector<64x256xf32>
      %c0_14 = arith.constant 0 : index
      %c0_15 = arith.constant 0 : index
      %17 = vector.load %arg6[%c0_14, %c0_15] : memref<64x256xf32, #tpu.memory_space<vmem>>, vector<64x256xf32>
      tpu.vector_store %arg6[%c0_14, %c0_15], %16 {strides = array<i32>} : memref<64x256xf32, #tpu.memory_space<vmem>>, vector<64x256xf32>,
    } else {
    }
    return
  }
  func.func @transform_0(%arg0: i32, %arg1: i32, %arg2: i32) -> (i32, i32) {
    %c0_i32 = arith.constant 0 : i32
    return %arg0, %arg2 : i32, i32
  }
  func.func @transform_1(%arg0: i32, %arg1: i32, %arg2: i32) -> (i32, i32) {
    %c0_i32 = arith.constant 0 : i32
    return %arg2, %arg1 : i32, i32
  }
  func.func @transform_2(%arg0: i32, %arg1: i32, %arg2: i32) -> (i32, i32) {
    %c0_i32 = arith.constant 0 : i32
    %c0_i32_0 = arith.constant 0 : i32
    return %c0_i32, %arg1 : i32, i32
  }
  func.func @transform_3(%arg0: i32, %arg1: i32, %arg2: i32) -> (i32, i32) {
    %c0_i32 = arith.constant 0 : i32
    return %arg0, %arg1 : i32, i32
  }
}

</mosaic_0001>

<llo_original>
// kernel: _lambda_.5
$region0: #{_lambda_.5}
  #allocation0 [shape = 'u32[]', space=smem, size = 0x4, offset = 0x4, fixed_abs, tag = 'smem constant byte address 0x4 - core index']
  #allocation1 [shape = 'u32[144,128]{1,0:T(1,128)}', space=vmem, size = 0x12000, scoped, tag = 'internal scratch']
  #allocation2 [shape = 'f32[64,128]{1,0:T(8,128)}', space=vmem, size = 0x8000, scoped, tag = 'scratch operand']
  %s0 = inlined_call_operand.vmem [shape: f32[64,128], index: 0, kind: input, shape index: {}]
  %s1 = inlined_call_operand.vmem [shape: bf16[128,128], index: 1, kind: input, shape index: {}]
  %s2 = inlined_call_operand.vmem [shape: f32[1,128], index: 2, kind: input, shape index: {}]
  %s3 = inlined_call_operand.vmem [shape: f32[64,128], index: 3, kind: output, shape index: {}]
  %s4 = sld [smem:[#allocation0]]
  $region30: #{_lambda_.5} parent=0
    _
  %s6 = ssub.s32 1, %s4
  %s7 = scalar_select 0, %s6, %s4
  // Predicated region
  $region2: #{_lambda_.5} parent=0 // pred_check
    _
  $region3: #{_lambda_.5} parent=0 // pred_check_branch
    %9 = sbr.rel (0) target = $region5
  $region4: #{_lambda_.5} parent=0 // pred_region
    _
  $region5: #{_lambda_.5} parent=0 // pred_fallthru
    _
  // Predicated region
  $region6: #{_lambda_.5} parent=0 // pred_check
    _
  $region7: #{_lambda_.5} parent=0 // pred_check_branch
    %11 = sbr.rel (0) target = $region9
  $region8: #{_lambda_.5} parent=0 // pred_region
    _
  $region9: #{_lambda_.5} parent=0 // pred_fallthru
    _
  // Predicated region
  $region10: #{_lambda_.5} parent=0 // pred_check
    _
  $region11: #{_lambda_.5} parent=0 // pred_check_branch
    %13 = sbr.rel (0) target = $region13
  $region12: #{_lambda_.5} parent=0 // pred_region
    _
  $region13: #{_lambda_.5} parent=0 // pred_fallthru
    _
  %p15 = scmp.eq.s32.totalorder 0, 0
  // Predicated region
  $region14: #{_lambda_.5} parent=0 // pred_check
    %p16 = pneg %p15
  $region15: #{_lambda_.5} parent=0 // pred_check_branch
    %18 = sbr.rel (%p16) target = $region17
  $region16: #{_lambda_.5} parent=0 // pred_region
    %19 = vst [vmem:[#allocation2] sm:$0xff] 0.0
    %20 = vst [vmem:[#allocation2 + $0x8] sm:$0xff] 0.0
    %21 = vst [vmem:[#allocation2 + $0x10] sm:$0xff] 0.0
    %22 = vst [vmem:[#allocation2 + $0x18] sm:$0xff] 0.0
    %23 = vst [vmem:[#allocation2 + $0x20] sm:$0xff] 0.0
    %24 = vst [vmem:[#allocation2 + $0x28] sm:$0xff] 0.0
    %25 = vst [vmem:[#allocation2 + $0x30] sm:$0xff] 0.0
    %26 = vst [vmem:[#allocation2 + $0x38] sm:$0xff] 0.0
  $region17: #{_lambda_.5} parent=0 // pred_fallthru
    _
  %v27 = vld [vmem:[#allocation2] sm:$0xff]
  %v28 = vld [vmem:[#allocation2 + $0x8] sm:$0xff]
  %v29 = vld [vmem:[#allocation2 + $0x10] sm:$0xff]
  %v30 = vld [vmem:[#allocation2 + $0x18] sm:$0xff]
  %v31 = vld [vmem:[#allocation2 + $0x20] sm:$0xff]
  %v32 = vld [vmem:[#allocation2 + $0x28] sm:$0xff]
  %v33 = vld [vmem:[#allocation2 + $0x30] sm:$0xff]
  %v34 = vld [vmem:[#allocation2 + $0x38] sm:$0xff]
  %v35 = vld [vmem:[%s0] sm:$0xff]
  %v36 = vld [vmem:[%s0 + $0x8] sm:$0xff]
  %v37 = vld [vmem:[%s0 + $0x10] sm:$0xff]
  %v38 = vld [vmem:[%s0 + $0x18] sm:$0xff]
  %v39 = vld [vmem:[%s0 + $0x20] sm:$0xff]
  %v40 = vld [vmem:[%s0 + $0x28] sm:$0xff]
  %v41 = vld [vmem:[%s0 + $0x30] sm:$0xff]
  %v42 = vld [vmem:[%s0 + $0x38] sm:$0xff]
  %v43 = vpack.c.bf16 %v36, %v35
  %v44 = vpack.c.bf16 %v38, %v37
  %v45 = vpack.c.bf16 %v40, %v39
  %v46 = vpack.c.bf16 %v42, %v41
  %v47 = vld [vmem:[%s1] sm:$0xf]
  %v48 = vld [vmem:[%s1 + $0x4] sm:$0xf]
  %v49 = vld [vmem:[%s1 + $0x8] sm:$0xf]
  %v50 = vld [vmem:[%s1 + $0xc] sm:$0xf]
  %v51 = vld [vmem:[%s1 + $0x10] sm:$0xf]
  %v52 = vld [vmem:[%s1 + $0x14] sm:$0xf]
  %v53 = vld [vmem:[%s1 + $0x18] sm:$0xf]
  %v54 = vld [vmem:[%s1 + $0x1c] sm:$0xf]
  %v55 = vld [vmem:[%s1 + $0x20] sm:$0xf]
  %v56 = vld [vmem:[%s1 + $0x24] sm:$0xf]
  %v57 = vld [vmem:[%s1 + $0x28] sm:$0xf]
  %v58 = vld [vmem:[%s1 + $0x2c] sm:$0xf]
  %v59 = vld [vmem:[%s1 + $0x30] sm:$0xf]
  %v60 = vld [vmem:[%s1 + $0x34] sm:$0xf]
  %v61 = vld [vmem:[%s1 + $0x38] sm:$0xf]
  %v62 = vld [vmem:[%s1 + $0x3c] sm:$0xf]
  %v79 = vunpack.c.l.b16 %v47
  %v80 = vunpack.c.l.b16 %v48
  %v81 = vunpack.c.l.b16 %v49
  %v82 = vunpack.c.l.b16 %v50
  %v83 = vunpack.c.l.b16 %v51
  %v84 = vunpack.c.l.b16 %v52
  %v85 = vunpack.c.l.b16 %v53
  %v86 = vunpack.c.l.b16 %v54
  %v87 = vunpack.c.l.b16 %v55
  %v88 = vunpack.c.l.b16 %v56
  %v89 = vunpack.c.l.b16 %v57
  %v90 = vunpack.c.l.b16 %v58
  %v91 = vunpack.c.l.b16 %v59
  %v92 = vunpack.c.l.b16 %v60
  %v93 = vunpack.c.l.b16 %v61
  %v94 = vunpack.c.l.b16 %v62
  %v95 = vpack.c.b16 %v80, %v79
  %v96 = vpack.c.b16 %v82, %v81
  %v97 = vpack.c.b16 %v84, %v83
  %v98 = vpack.c.b16 %v86, %v85
  %v99 = vpack.c.b16 %v88, %v87
  %v100 = vpack.c.b16 %v90, %v89
  %v101 = vpack.c.b16 %v92, %v91
  %v102 = vpack.c.b16 %v94, %v93
  %111 = vmatprep.subr.bf16.mxu0 0
  %112 = vmatpush1.bf16.msra.mxu0 %v102
  %113 = vmatprep.subr.bf16.mxu0 0
  %114 = vmatpush1.bf16.msra.mxu0 %v101
  %115 = vmatprep.subr.bf16.mxu0 0
  %116 = vmatpush1.bf16.msra.mxu0 %v100
  %117 = vmatprep.subr.bf16.mxu0 0
  %118 = vmatpush1.bf16.msra.mxu0 %v99
  %119 = vmatprep.subr.bf16.mxu0 0
  %120 = vmatpush1.bf16.msra.mxu0 %v98
  %121 = vmatprep.subr.bf16.mxu0 0
  %122 = vmatpush1.bf16.msra.mxu0 %v97
  %123 = vmatprep.subr.bf16.mxu0 0
  %124 = vmatpush1.bf16.msra.mxu0 %v96
  %125 = vmatprep.subr.bf16.mxu0 0
  %126 = vmatpush1.bf16.msra.mxu0 %v95
  %127 = vmatprep.subr.bf16.mxu0 0
  %128 = vmatpush2.bf16.msra.mxu0 0
  %129 = vmatprep.subr.bf16.mxu0 0
  %130 = vmatpush2.bf16.msra.mxu0 0
  %131 = vmatprep.subr.bf16.mxu0 0
  %132 = vmatpush2.bf16.msra.mxu0 0
  %133 = vmatprep.subr.bf16.mxu0 0
  %134 = vmatpush2.bf16.msra.mxu0 0
  %135 = vmatprep.subr.bf16.mxu0 0
  %136 = vmatpush2.bf16.msra.mxu0 0
  %137 = vmatprep.subr.bf16.mxu0 0
  %138 = vmatpush2.bf16.msra.mxu0 0
  %139 = vmatprep.subr.bf16.mxu0 0
  %140 = vmatpush2.bf16.msra.mxu0 0
  %141 = vmatprep.subr.bf16.mxu0 0
  %142 = vmatpush2.bf16.msra.mxu0 0
  %143 = vmatprep.mubr.bf16.mxu0 0
  %144 = vmatmul.mubr.bf16.gmra.mxu0 %v43
  %v145 = vpop.f32.mrf.mxu0
  %v146 = vadd.f32 0.0, %v145
  %v147 = vpop.f32.mrf.mxu0
  %v148 = vpop.f32.mrf.mxu0
  %v149 = vadd.f32 0.0, %v148
  %v150 = vpop.f32.mrf.mxu0
  %151 = vmatprep.mubr.bf16.mxu0 0
  %152 = vmatmul.mubr.bf16.gmra.mxu0 %v44
  %v153 = vpop.f32.mrf.mxu0
  %v154 = vadd.f32 0.0, %v153
  %v155 = vpop.f32.mrf.mxu0
  %v156 = vpop.f32.mrf.mxu0
  %v157 = vadd.f32 0.0, %v156
  %v158 = vpop.f32.mrf.mxu0
  %159 = vmatprep.mubr.bf16.mxu0 0
  %160 = vmatmul.mubr.bf16.gmra.mxu0 %v45
  %v161 = vpop.f32.mrf.mxu0
  %v162 = vadd.f32 0.0, %v161
  %v163 = vpop.f32.mrf.mxu0
  %v164 = vpop.f32.mrf.mxu0
  %v165 = vadd.f32 0.0, %v164
  %v166 = vpop.f32.mrf.mxu0
  %167 = vmatprep.mubr.bf16.mxu0 0
  %168 = vmatmul.mubr.bf16.gmra.mxu0 %v46
  %v169 = vpop.f32.mrf.mxu0
  %v170 = vadd.f32 0.0, %v169
  %v171 = vpop.f32.mrf.mxu0
  %v172 = vpop.f32.mrf.mxu0
  %v173 = vadd.f32 0.0, %v172
  %v174 = vpop.f32.mrf.mxu0
  %175 = vdwg.mxu0
  %v176 = vadd.f32 %v27, %v146
  %v177 = vadd.f32 %v28, %v149
  %v178 = vadd.f32 %v29, %v154
  %v179 = vadd.f32 %v30, %v157
  %v180 = vadd.f32 %v31, %v162
  %v181 = vadd.f32 %v32, %v165
  %v182 = vadd.f32 %v33, %v170
  %v183 = vadd.f32 %v34, %v173
  %184 = vst [vmem:[#allocation2] sm:$0xff] %v176
  %185 = vst [vmem:[#allocation2 + $0x8] sm:$0xff] %v177
  %186 = vst [vmem:[#allocation2 + $0x10] sm:$0xff] %v178
  %187 = vst [vmem:[#allocation2 + $0x18] sm:$0xff] %v179
  %188 = vst [vmem:[#allocation2 + $0x20] sm:$0xff] %v180
  %189 = vst [vmem:[#allocation2 + $0x28] sm:$0xff] %v181
  %190 = vst [vmem:[#allocation2 + $0x30] sm:$0xff] %v182
  %191 = vst [vmem:[#allocation2 + $0x38] sm:$0xff] %v183
  // Predicated region
  $region18: #{_lambda_.5} parent=0 // pred_check
    %p192 = pneg %p15
  $region19: #{_lambda_.5} parent=0 // pred_check_branch
    %194 = sbr.rel (%p192) target = $region21
  $region20: #{_lambda_.5} parent=0 // pred_region
    %v195 = vld [vmem:[#allocation2] sm:$0xff]
    %v196 = vld [vmem:[#allocation2 + $0x8] sm:$0xff]
    %v197 = vld [vmem:[#allocation2 + $0x10] sm:$0xff]
    %v198 = vld [vmem:[#allocation2 + $0x18] sm:$0xff]
    %v199 = vld [vmem:[#allocation2 + $0x20] sm:$0xff]
    %v200 = vld [vmem:[#allocation2 + $0x28] sm:$0xff]
    %v201 = vld [vmem:[#allocation2 + $0x30] sm:$0xff]
    %v202 = vld [vmem:[#allocation2 + $0x38] sm:$0xff]
    %v203 = vld [vmem:[%s2] sm:$0x1]
    %v205 = vlaneseq
    %v206 = vshrl.u32 %v205, 7
    %v207 = vsub.s32 0, %v206
    %v208 = vrot.slane %v203, %v207
    %v210 = vadd.f32 %v195, %v208
    %v211 = vadd.f32 %v196, %v208
    %v212 = vadd.f32 %v197, %v208
    %v213 = vadd.f32 %v198, %v208
    %v214 = vadd.f32 %v199, %v208
    %v215 = vadd.f32 %v200, %v208
    %v216 = vadd.f32 %v201, %v208
    %v217 = vadd.f32 %v202, %v208
    %218 = vst [vmem:[%s3] sm:$0xff] %v210
    %219 = vst [vmem:[%s3 + $0x8] sm:$0xff] %v211
    %220 = vst [vmem:[%s3 + $0x10] sm:$0xff] %v212
    %221 = vst [vmem:[%s3 + $0x18] sm:$0xff] %v213
    %222 = vst [vmem:[%s3 + $0x20] sm:$0xff] %v214
    %223 = vst [vmem:[%s3 + $0x28] sm:$0xff] %v215
    %224 = vst [vmem:[%s3 + $0x30] sm:$0xff] %v216
    %225 = vst [vmem:[%s3 + $0x38] sm:$0xff] %v217
  $region21: #{_lambda_.5} parent=0 // pred_fallthru
    _
  // Predicated region
  $region22: #{_lambda_.5} parent=0 // pred_check
    _
  $region23: #{_lambda_.5} parent=0 // pred_check_branch
    %227 = sbr.rel (0) target = $region25
  $region24: #{_lambda_.5} parent=0 // pred_region
    _
  $region25: #{_lambda_.5} parent=0 // pred_fallthru
    _
  // Predicated region
  $region26: #{_lambda_.5} parent=0 // pred_check
    _
  $region27: #{_lambda_.5} parent=0 // pred_check_branch
    %229 = sbr.rel (0) target = $region29
  $region28: #{_lambda_.5} parent=0 // pred_region
    _
  $region29: #{_lambda_.5} parent=0 // pred_fallthru
    _

// kernel: _lambda_.6
$region0: #{_lambda_.6}
  #allocation0 [shape = 'u32[]', space=smem, size = 0x4, offset = 0x4, fixed_abs, tag = 'smem constant byte address 0x4 - core index']
  #allocation1 [shape = 'u32[144,128]{1,0:T(1,128)}', space=vmem, size = 0x12000, scoped, tag = 'internal scratch']
  #allocation2 [shape = 'f32[8,128]{1,0:T(8,128)}', space=vmem, size = 0x1000, scoped, tag = 'scratch operand']
  %s0 = inlined_call_operand.vmem [shape: f32[8,8,128], index: 0, kind: input, shape index: {}]
  %s1 = inlined_call_operand.vmem [shape: bf16[128,128], index: 1, kind: input, shape index: {}]
  %s2 = inlined_call_operand.vmem [shape: f32[8,128], index: 2, kind: input, shape index: {}]
  %s3 = inlined_call_operand.vmem [shape: f32[8,8,128], index: 3, kind: output, shape index: {}]
  %s4 = sld [smem:[#allocation0]]
  $region49: #{_lambda_.6} parent=0
    _
  %s6 = ssub.s32 1, %s4
  %s7 = scalar_select 0, %s6, %s4
  loop: start=0, step=1, limit=4
  $region2: #{_lambda_.6} parent=0 // loop_pre_header
    _
  $region3: #{_lambda_.6} parent=0 // loop_header
    %s9 = sphi 0, %s13
    %p10 = scmp.ge.s32.totalorder %s9, 4
    %s19 = sphi 0, %s21
    %s22 = sphi 0, %s19
    %s23 = sphi 0, %s22
    %s39 = sphi 0, %s23
    %s43 = sphi 0, %s43
    %s45 = sphi 0, %s43
    %s46 = sphi 0, %s45
    %s60 = sphi 0, %s46
    %s64 = sphi 0, %s64
    %s66 = sphi 0, %s64
    %s67 = sphi 0, %s66
    %s81 = sphi 0, %s67
    %s87 = sphi 0, %s89
    %s90 = sphi 0, %s87
    %s91 = sphi 0, %s90
    %s107 = sphi 0, %s91
  $region4: #{_lambda_.6} parent=0 // loop_header_branch
    %12 = sbr.rel (%p10) target = $region8
  $region5: #{_lambda_.6} parent=0 // loop_body
    %s14 = ssub.s32 %s9, 1
    %s15 = ssub.s32 %s9, 2
    %s16 = sadd.s32 %s9, 1
    %s17 = ssub.s32 %s9, %s16
    %p18 = scmp.eq.s32.totalorder %s17, 0
    %s20 = sadd.s32 %s19, 1
    %s21 = scalar_select %p18, %s19, %s20
    %p24 = pneg %p18
    %p25 = scmp.eq.s32.totalorder %s9, 1
    %p26 = por %p24, %p25
    %p27 = scmp.ne.s32.totalorder %s19, %s22
    %p28 = scmp.eq.s32.totalorder %s9, 0
    %p29 = por %p27, %p28
    %p30 = scmp.ne.s32.totalorder %s19, %s22
    %p31 = scmp.eq.s32.totalorder %s14, 1
    %p32 = por %p30, %p31
    %p33 = scmp.ne.s32.totalorder %s22, %s23
    %p34 = scmp.eq.s32.totalorder %s14, 0
    %p35 = por %p33, %p34
    %p36 = scmp.ne.s32.totalorder %s22, %s23
    %p37 = scmp.eq.s32.totalorder %s15, 1
    %p38 = por %p36, %p37
    %p40 = scmp.ne.s32.totalorder %s23, %s39
    %p41 = scmp.eq.s32.totalorder %s15, 0
    %p42 = por %p40, %p41
    %s44 = sadd.s32 %s43, 1
    %p47 = scmp.eq.s32.totalorder %s9, 1
    %p48 = scmp.ne.s32.totalorder %s43, %s45
    %p49 = scmp.eq.s32.totalorder %s9, 0
    %p50 = por %p48, %p49
    %p51 = scmp.ne.s32.totalorder %s43, %s45
    %p52 = scmp.eq.s32.totalorder %s14, 1
    %p53 = por %p51, %p52
    %p54 = scmp.ne.s32.totalorder %s45, %s46
    %p55 = scmp.eq.s32.totalorder %s14, 0
    %p56 = por %p54, %p55
    %p57 = scmp.ne.s32.totalorder %s45, %s46
    %p58 = scmp.eq.s32.totalorder %s15, 1
    %p59 = por %p57, %p58
    %p61 = scmp.ne.s32.totalorder %s46, %s60
    %p62 = scmp.eq.s32.totalorder %s15, 0
    %p63 = por %p61, %p62
    %s65 = sadd.s32 %s64, 1
    %p68 = scmp.eq.s32.totalorder %s9, 1
    %p69 = scmp.ne.s32.totalorder %s64, %s66
    %p70 = scmp.eq.s32.totalorder %s9, 0
    %p71 = por %p69, %p70
    %p72 = scmp.ne.s32.totalorder %s64, %s66
    %p73 = scmp.eq.s32.totalorder %s14, 1
    %p74 = por %p72, %p73
    %p75 = scmp.ne.s32.totalorder %s66, %s67
    %p76 = scmp.eq.s32.totalorder %s14, 0
    %p77 = por %p75, %p76
    %p78 = scmp.ne.s32.totalorder %s66, %s67
    %p79 = scmp.eq.s32.totalorder %s15, 1
    %p80 = por %p78, %p79
    %p82 = scmp.ne.s32.totalorder %s67, %s81
    %p83 = scmp.eq.s32.totalorder %s15, 0
    %p84 = por %p82, %p83
    %s85 = ssub.s32 %s9, %s16
    %p86 = scmp.eq.s32.totalorder %s85, 0
    %s88 = sadd.s32 %s87, 1
    %s89 = scalar_select %p86, %s87, %s88
    %p92 = pneg %p86
    %p93 = scmp.eq.s32.totalorder %s9, 1
    %p94 = por %p92, %p93
    %p95 = scmp.ne.s32.totalorder %s87, %s90
    %p96 = scmp.eq.s32.totalorder %s9, 0
    %p97 = por %p95, %p96
    %p98 = scmp.ne.s32.totalorder %s87, %s90
    %p99 = scmp.eq.s32.totalorder %s14, 1
    %p100 = por %p98, %p99
    %p101 = scmp.ne.s32.totalorder %s90, %s91
    %p102 = scmp.eq.s32.totalorder %s14, 0
    %p103 = por %p101, %p102
    %p104 = scmp.ne.s32.totalorder %s90, %s91
    %p105 = scmp.eq.s32.totalorder %s15, 1
    %p106 = por %p104, %p105
    %p108 = scmp.ne.s32.totalorder %s91, %s107
    %p109 = scmp.eq.s32.totalorder %s15, 0
    %p110 = por %p108, %p109
    %p111 = scmp.le.s32.totalorder 1, %s9
    %p112 = scmp.lt.s32.totalorder %s9, 3
    %p113 = pnand %p111, %p112
    %p114 = pneg %p113
    // Predicated region
    $region9: #{_lambda_.6} parent=5 // pred_check
      _
    $region10: #{_lambda_.6} parent=5 // pred_check_branch
      %116 = sbr.rel (%p113) target = $region12
    $region11: #{_lambda_.6} parent=5 // pred_region
      %s117 = ssub.s32 %s9, 1
      // Predicated region
      $region13: #{_lambda_.6} parent=11 // pred_check
        %p118 = pneg %p56
      $region14: #{_lambda_.6} parent=11 // pred_check_branch
        %120 = sbr.rel (%p118) target = $region16
      $region15: #{_lambda_.6} parent=11 // pred_region
        _
      $region16: #{_lambda_.6} parent=11 // pred_fallthru
        _
      // Predicated region
      $region17: #{_lambda_.6} parent=11 // pred_check
        %p121 = pneg %p77
      $region18: #{_lambda_.6} parent=11 // pred_check_branch
        %123 = sbr.rel (%p121) target = $region20
      $region19: #{_lambda_.6} parent=11 // pred_region
        _
      $region20: #{_lambda_.6} parent=11 // pred_fallthru
        _
    $region12: #{_lambda_.6} parent=5 // pred_fallthru
      _
    %p124 = scmp.lt.s32.totalorder %s9, 2
    // Predicated region
    $region21: #{_lambda_.6} parent=5 // pred_check
      %p125 = pneg %p124
    $region22: #{_lambda_.6} parent=5 // pred_check_branch
      %127 = sbr.rel (%p125) target = $region24
    $region23: #{_lambda_.6} parent=5 // pred_region
      // Predicated region
      $region25: #{_lambda_.6} parent=23 // pred_check
        %p128 = pneg %p29
      $region26: #{_lambda_.6} parent=23 // pred_check_branch
        %130 = sbr.rel (%p128) target = $region28
      $region27: #{_lambda_.6} parent=23 // pred_region
        %s131 = smul.u32 4, %s9
        %p132 = scmp.lt.s32.totalorder %s131, 7
        %s133 = scalar_select %p132, %s131, 7
        %s134 = smul.addr %s133, 8
        %s135 = scalar_lea.vmem %s0, %s134
        %s136 = smul.u32 4, %s9
      $region28: #{_lambda_.6} parent=23 // pred_fallthru
        _
    $region24: #{_lambda_.6} parent=5 // pred_fallthru
      _
    %p137 = scmp.le.s32.totalorder 1, %s9
    %p138 = scmp.lt.s32.totalorder %s9, 3
    %p139 = pnand %p137, %p138
    %p140 = pneg %p139
    // Predicated region
    $region29: #{_lambda_.6} parent=5 // pred_check
      _
    $region30: #{_lambda_.6} parent=5 // pred_check_branch
      %142 = sbr.rel (%p139) target = $region32
    $region31: #{_lambda_.6} parent=5 // pred_region
      %s143 = ssub.s32 %s9, 1
      %s144 = smul.u32 4, %s14
      %p145 = scmp.lt.s32.totalorder %s144, 7
      %s146 = scalar_select %p145, %s144, 7
      %s147 = smul.addr %s146, 8
      %s148 = scalar_lea.vmem %s0, %s147
      %p149 = pneg %p35
      %p150 = pneg %p32
      %p151 = pneg %p56
      %p152 = pneg %p53
      %p153 = pneg %p77
      %p154 = pneg %p74
      %p155 = pneg %p103
      %p156 = pneg %p100
      %s157 = smul.u32 4, %s14
      %p158 = scmp.lt.s32.totalorder %s157, 7
      %s159 = scalar_select %p158, %s157, 7
      %s160 = smul.addr %s159, 8
      %s161 = scalar_lea.vmem %s3, %s160
      %s162 = smul.u32 4, %s14
      %p163 = scmp.lt.s32.totalorder %s162, 7
      %s164 = scalar_select %p163, %s162, 7
      %s165 = smul.addr %s164, 8
      %s166 = scalar_lea.vmem %s0, %s165
      %s167 = smul.u32 4, %s14
      %s168 = smul.u32 4, %s14
      %p169 = scmp.lt.s32.totalorder %s168, 7
      %s170 = scalar_select %p169, %s168, 7
      %s171 = smul.addr %s170, 8
      %s172 = scalar_lea.vmem %s3, %s171
      %s173 = smul.u32 4, %s14
      %p175 = scmp.eq.s32.totalorder %s14, 0
      // Predicated region
      $region33: #{_lambda_.6} parent=31 // pred_check
        %p176 = pneg %p175
      $region34: #{_lambda_.6} parent=31 // pred_check_branch
        %178 = sbr.rel (%p176) target = $region36
      $region35: #{_lambda_.6} parent=31 // pred_region
        %v179 = vld [vmem:[%s2] sm:$0xff]
        %180 = vst [vmem:[#allocation2] sm:$0xff] %v179
      $region36: #{_lambda_.6} parent=31 // pred_fallthru
        _
      %v181 = vld [vmem:[%s1] sm:$0xf]
      %v182 = vld [vmem:[%s1 + $0x4] sm:$0xf]
      %v183 = vld [vmem:[%s1 + $0x8] sm:$0xf]
      %v184 = vld [vmem:[%s1 + $0xc] sm:$0xf]
      %v185 = vld [vmem:[%s1 + $0x10] sm:$0xf]
      %v186 = vld [vmem:[%s1 + $0x14] sm:$0xf]
      %v187 = vld [vmem:[%s1 + $0x18] sm:$0xf]
      %v188 = vld [vmem:[%s1 + $0x1c] sm:$0xf]
      %v189 = vld [vmem:[%s1 + $0x20] sm:$0xf]
      %v190 = vld [vmem:[%s1 + $0x24] sm:$0xf]
      %v191 = vld [vmem:[%s1 + $0x28] sm:$0xf]
      %v192 = vld [vmem:[%s1 + $0x2c] sm:$0xf]
      %v193 = vld [vmem:[%s1 + $0x30] sm:$0xf]
      %v194 = vld [vmem:[%s1 + $0x34] sm:$0xf]
      %v195 = vld [vmem:[%s1 + $0x38] sm:$0xf]
      %v196 = vld [vmem:[%s1 + $0x3c] sm:$0xf]
      %v197 = vld [vmem:[#allocation2] sm:$0xff]
      %v198 = vld [vmem:[%s166] sm:$0xff]
      %v199 = vpack.c.bf16 %v197, %v197
      %v216 = vunpack.c.l.b16 %v181
      %v217 = vunpack.c.l.b16 %v182
      %v218 = vunpack.c.l.b16 %v183
      %v219 = vunpack.c.l.b16 %v184
      %v220 = vunpack.c.l.b16 %v185
      %v221 = vunpack.c.l.b16 %v186
      %v222 = vunpack.c.l.b16 %v187
      %v223 = vunpack.c.l.b16 %v188
      %v224 = vunpack.c.l.b16 %v189
      %v225 = vunpack.c.l.b16 %v190
      %v226 = vunpack.c.l.b16 %v191
      %v227 = vunpack.c.l.b16 %v192
      %v228 = vunpack.c.l.b16 %v193
      %v229 = vunpack.c.l.b16 %v194
      %v230 = vunpack.c.l.b16 %v195
      %v231 = vunpack.c.l.b16 %v196
      %v232 = vpack.c.b16 %v217, %v216
      %v233 = vpack.c.b16 %v219, %v218
      %v234 = vpack.c.b16 %v221, %v220
      %v235 = vpack.c.b16 %v223, %v222
      %v236 = vpack.c.b16 %v225, %v224
      %v237 = vpack.c.b16 %v227, %v226
      %v238 = vpack.c.b16 %v229, %v228
      %v239 = vpack.c.b16 %v231, %v230
      %248 = vmatprep.subr.bf16.mxu0 0
      %249 = vmatpush1.bf16.msra.mxu0 %v239
      %250 = vmatprep.subr.bf16.mxu0 0
      %251 = vmatpush1.bf16.msra.mxu0 %v238
      %252 = vmatprep.subr.bf16.mxu0 0
      %253 = vmatpush1.bf16.msra.mxu0 %v237
      %254 = vmatprep.subr.bf16.mxu0 0
      %255 = vmatpush1.bf16.msra.mxu0 %v236
      %256 = vmatprep.subr.bf16.mxu0 0
      %257 = vmatpush1.bf16.msra.mxu0 %v235
      %258 = vmatprep.subr.bf16.mxu0 0
      %259 = vmatpush1.bf16.msra.mxu0 %v234
      %260 = vmatprep.subr.bf16.mxu0 0
      %261 = vmatpush1.bf16.msra.mxu0 %v233
      %262 = vmatprep.subr.bf16.mxu0 0
      %263 = vmatpush1.bf16.msra.mxu0 %v232
      %264 = vmatprep.subr.bf16.mxu0 0
      %265 = vmatpush2.bf16.msra.mxu0 0
      %266 = vmatprep.subr.bf16.mxu0 0
      %267 = vmatpush2.bf16.msra.mxu0 0
      %268 = vmatprep.subr.bf16.mxu0 0
      %269 = vmatpush2.bf16.msra.mxu0 0
      %270 = vmatprep.subr.bf16.mxu0 0
      %271 = vmatpush2.bf16.msra.mxu0 0
      %272 = vmatprep.subr.bf16.mxu0 0
      %273 = vmatpush2.bf16.msra.mxu0 0
      %274 = vmatprep.subr.bf16.mxu0 0
      %275 = vmatpush2.bf16.msra.mxu0 0
      %276 = vmatprep.subr.bf16.mxu0 0
      %277 = vmatpush2.bf16.msra.mxu0 0
      %278 = vmatprep.subr.bf16.mxu0 0
      %279 = vmatpush2.bf16.msra.mxu0 0
      %280 = vmatprep.mubr.bf16.mxu0 0
      %281 = vmatmul.mubr.bf16.gmra.mxu0 %v199
      %v282 = vpop.f32.mrf.mxu0
      %v283 = vadd.f32 0.0, %v282
      %v284 = vpop.f32.mrf.mxu0
      %v285 = vpop.f32.mrf.mxu0
      %v286 = vpop.f32.mrf.mxu0
      %287 = vdwg.mxu0
      %v288 = vadd.f32 %v198, %v283
      %v289 = vtanh.pop %v288
      %290 = vst [vmem:[%s172] sm:$0xff] %v289
      %s291 = scalar_lea.vmem %s166, 8
      %v292 = vld [vmem:[%s291] sm:$0xff]
      %v293 = vpack.c.bf16 %v289, %v289
      %294 = vmatprep.subr.bf16.mxu0 0
      %295 = vmatpush1.bf16.msra.mxu0 %v239
      %296 = vmatprep.subr.bf16.mxu0 0
      %297 = vmatpush1.bf16.msra.mxu0 %v238
      %298 = vmatprep.subr.bf16.mxu0 0
      %299 = vmatpush1.bf16.msra.mxu0 %v237
      %300 = vmatprep.subr.bf16.mxu0 0
      %301 = vmatpush1.bf16.msra.mxu0 %v236
      %302 = vmatprep.subr.bf16.mxu0 0
      %303 = vmatpush1.bf16.msra.mxu0 %v235
      %304 = vmatprep.subr.bf16.mxu0 0
      %305 = vmatpush1.bf16.msra.mxu0 %v234
      %306 = vmatprep.subr.bf16.mxu0 0
      %307 = vmatpush1.bf16.msra.mxu0 %v233
      %308 = vmatprep.subr.bf16.mxu0 0
      %309 = vmatpush1.bf16.msra.mxu0 %v232
      %310 = vmatprep.subr.bf16.mxu0 0
      %311 = vmatpush2.bf16.msra.mxu0 0
      %312 = vmatprep.subr.bf16.mxu0 0
      %313 = vmatpush2.bf16.msra.mxu0 0
      %314 = vmatprep.subr.bf16.mxu0 0
      %315 = vmatpush2.bf16.msra.mxu0 0
      %316 = vmatprep.subr.bf16.mxu0 0
      %317 = vmatpush2.bf16.msra.mxu0 0
      %318 = vmatprep.subr.bf16.mxu0 0
      %319 = vmatpush2.bf16.msra.mxu0 0
      %320 = vmatprep.subr.bf16.mxu0 0
      %321 = vmatpush2.bf16.msra.mxu0 0
      %322 = vmatprep.subr.bf16.mxu0 0
      %323 = vmatpush2.bf16.msra.mxu0 0
      %324 = vmatprep.subr.bf16.mxu0 0
      %325 = vmatpush2.bf16.msra.mxu0 0
      %326 = vmatprep.mubr.bf16.mxu0 0
      %327 = vmatmul.mubr.bf16.gmra.mxu0 %v293
      %v328 = vpop.f32.mrf.mxu0
      %v329 = vadd.f32 0.0, %v328
      %v330 = vpop.f32.mrf.mxu0
      %v331 = vpop.f32.mrf.mxu0
      %v332 = vpop.f32.mrf.mxu0
      %333 = vdwg.mxu0
      %v334 = vadd.f32 %v292, %v329
      %v335 = vtanh.pop %v334
      %s336 = scalar_lea.vmem %s172, 8
      %337 = vst [vmem:[%s336] sm:$0xff] %v335
      %s338 = scalar_lea.vmem %s166, 16
      %v339 = vld [vmem:[%s338] sm:$0xff]
      %v340 = vpack.c.bf16 %v335, %v335
      %341 = vmatprep.subr.bf16.mxu0 0
      %342 = vmatpush1.bf16.msra.mxu0 %v239
      %343 = vmatprep.subr.bf16.mxu0 0
      %344 = vmatpush1.bf16.msra.mxu0 %v238
      %345 = vmatprep.subr.bf16.mxu0 0
      %346 = vmatpush1.bf16.msra.mxu0 %v237
      %347 = vmatprep.subr.bf16.mxu0 0
      %348 = vmatpush1.bf16.msra.mxu0 %v236
      %349 = vmatprep.subr.bf16.mxu0 0
      %350 = vmatpush1.bf16.msra.mxu0 %v235
      %351 = vmatprep.subr.bf16.mxu0 0
      %352 = vmatpush1.bf16.msra.mxu0 %v234
      %353 = vmatprep.subr.bf16.mxu0 0
      %354 = vmatpush1.bf16.msra.mxu0 %v233
      %355 = vmatprep.subr.bf16.mxu0 0
      %356 = vmatpush1.bf16.msra.mxu0 %v232
      %357 = vmatprep.subr.bf16.mxu0 0
      %358 = vmatpush2.bf16.msra.mxu0 0
      %359 = vmatprep.subr.bf16.mxu0 0
      %360 = vmatpush2.bf16.msra.mxu0 0
      %361 = vmatprep.subr.bf16.mxu0 0
      %362 = vmatpush2.bf16.msra.mxu0 0
      %363 = vmatprep.subr.bf16.mxu0 0
      %364 = vmatpush2.bf16.msra.mxu0 0
      %365 = vmatprep.subr.bf16.mxu0 0
      %366 = vmatpush2.bf16.msra.mxu0 0
      %367 = vmatprep.subr.bf16.mxu0 0
      %368 = vmatpush2.bf16.msra.mxu0 0
      %369 = vmatprep.subr.bf16.mxu0 0
      %370 = vmatpush2.bf16.msra.mxu0 0
      %371 = vmatprep.subr.bf16.mxu0 0
      %372 = vmatpush2.bf16.msra.mxu0 0
      %373 = vmatprep.mubr.bf16.mxu0 0
      %374 = vmatmul.mubr.bf16.gmra.mxu0 %v340
      %v375 = vpop.f32.mrf.mxu0
      %v376 = vadd.f32 0.0, %v375
      %v377 = vpop.f32.mrf.mxu0
      %v378 = vpop.f32.mrf.mxu0
      %v379 = vpop.f32.mrf.mxu0
      %380 = vdwg.mxu0
      %v381 = vadd.f32 %v339, %v376
      %v382 = vtanh.pop %v381
      %s383 = scalar_lea.vmem %s172, 16
      %384 = vst [vmem:[%s383] sm:$0xff] %v382
      %s385 = scalar_lea.vmem %s166, 24
      %v386 = vld [vmem:[%s385] sm:$0xff]
      %v387 = vpack.c.bf16 %v382, %v382
      %388 = vmatprep.subr.bf16.mxu0 0
      %389 = vmatpush1.bf16.msra.mxu0 %v239
      %390 = vmatprep.subr.bf16.mxu0 0
      %391 = vmatpush1.bf16.msra.mxu0 %v238
      %392 = vmatprep.subr.bf16.mxu0 0
      %393 = vmatpush1.bf16.msra.mxu0 %v237
      %394 = vmatprep.subr.bf16.mxu0 0
      %395 = vmatpush1.bf16.msra.mxu0 %v236
      %396 = vmatprep.subr.bf16.mxu0 0
      %397 = vmatpush1.bf16.msra.mxu0 %v235
      %398 = vmatprep.subr.bf16.mxu0 0
      %399 = vmatpush1.bf16.msra.mxu0 %v234
      %400 = vmatprep.subr.bf16.mxu0 0
      %401 = vmatpush1.bf16.msra.mxu0 %v233
      %402 = vmatprep.subr.bf16.mxu0 0
      %403 = vmatpush1.bf16.msra.mxu0 %v232
      %404 = vmatprep.subr.bf16.mxu0 0
      %405 = vmatpush2.bf16.msra.mxu0 0
      %406 = vmatprep.subr.bf16.mxu0 0
      %407 = vmatpush2.bf16.msra.mxu0 0
      %408 = vmatprep.subr.bf16.mxu0 0
      %409 = vmatpush2.bf16.msra.mxu0 0
      %410 = vmatprep.subr.bf16.mxu0 0
      %411 = vmatpush2.bf16.msra.mxu0 0
      %412 = vmatprep.subr.bf16.mxu0 0
      %413 = vmatpush2.bf16.msra.mxu0 0
      %414 = vmatprep.subr.bf16.mxu0 0
      %415 = vmatpush2.bf16.msra.mxu0 0
      %416 = vmatprep.subr.bf16.mxu0 0
      %417 = vmatpush2.bf16.msra.mxu0 0
      %418 = vmatprep.subr.bf16.mxu0 0
      %419 = vmatpush2.bf16.msra.mxu0 0
      %420 = vmatprep.mubr.bf16.mxu0 0
      %421 = vmatmul.mubr.bf16.gmra.mxu0 %v387
      %v422 = vpop.f32.mrf.mxu0
      %v423 = vadd.f32 0.0, %v422
      %v424 = vpop.f32.mrf.mxu0
      %v425 = vpop.f32.mrf.mxu0
      %v426 = vpop.f32.mrf.mxu0
      %427 = vdwg.mxu0
      %v428 = vadd.f32 %v386, %v423
      %v429 = vtanh.pop %v428
      %s430 = scalar_lea.vmem %s172, 24
      %431 = vst [vmem:[%s430] sm:$0xff] %v429
      %432 = vst [vmem:[#allocation2] sm:$0xff] %v429
      %s433 = smul.u32 4, %s14
      %p434 = scmp.lt.s32.totalorder %s433, 7
      %s435 = scalar_select %p434, %s433, 7
      %s436 = smul.addr %s435, 8
      %s437 = scalar_lea.vmem %s3, %s436
      // Predicated region
      $region37: #{_lambda_.6} parent=31 // pred_check
        %p438 = pneg %p100
      $region38: #{_lambda_.6} parent=31 // pred_check_branch
        %440 = sbr.rel (%p438) target = $region40
      $region39: #{_lambda_.6} parent=31 // pred_region
        %s441 = smul.u32 4, %s14
      $region40: #{_lambda_.6} parent=31 // pred_fallthru
        _
    $region32: #{_lambda_.6} parent=5 // pred_fallthru
      _
    %p442 = scmp.le.s32.totalorder 2, %s9
    // Predicated region
    $region41: #{_lambda_.6} parent=5 // pred_check
      %p443 = pneg %p442
    $region42: #{_lambda_.6} parent=5 // pred_check_branch
      %445 = sbr.rel (%p443) target = $region44
    $region43: #{_lambda_.6} parent=5 // pred_region
      %s446 = ssub.s32 %s9, 2
      // Predicated region
      $region45: #{_lambda_.6} parent=43 // pred_check
        %p447 = pneg %p106
      $region46: #{_lambda_.6} parent=43 // pred_check_branch
        %449 = sbr.rel (%p447) target = $region48
      $region47: #{_lambda_.6} parent=43 // pred_region
        %s450 = smul.u32 4, %s15
        %p451 = scmp.lt.s32.totalorder %s450, 7
        %s452 = scalar_select %p451, %s450, 7
        %s453 = smul.addr %s452, 8
        %s454 = scalar_lea.vmem %s3, %s453
      $region48: #{_lambda_.6} parent=43 // pred_fallthru
        _
    $region44: #{_lambda_.6} parent=5 // pred_fallthru
      _
  $region6: #{_lambda_.6} parent=0 // loop_footer
    %s13 = sadd.s32 1, %s9
  $region7: #{_lambda_.6} parent=0 // loop_footer_branch
    %8 = sbr.rel target = $region3
  $region8: #{_lambda_.6} parent=0 // loop_exit
    _

// kernel: _lambda_.9
$region0: #{_lambda_.9}
  #allocation0 [shape = 'u32[]', space=smem, size = 0x4, offset = 0x4, fixed_abs, tag = 'smem constant byte address 0x4 - core index']
  #allocation1 [shape = 'u32[144,128]{1,0:T(1,128)}', space=vmem, size = 0x12000, scoped, tag = 'internal scratch']
  #allocation2 [shape = 'f32[64,256]{1,0:T(8,128)}', space=vmem, size = 0x10000, scoped, tag = 'scratch operand']
  %s0 = inlined_call_operand.vmem [shape: f32[64,128], index: 0, kind: input, shape index: {}]
  %s1 = inlined_call_operand.vmem [shape: bf16[128,256], index: 1, kind: input, shape index: {}]
  %s2 = inlined_call_operand.vmem [shape: f32[1,256], index: 2, kind: input, shape index: {}]
  %s3 = inlined_call_operand.hbm [shape: f32[64,256], index: 3, kind: output, shape index: {}]
  %s4 = sld [smem:[#allocation0]]
  $region30: #{_lambda_.9} parent=0
    _
  %s6 = ssub.s32 1, %s4
  %s7 = scalar_select 0, %s6, %s4
  $region1: #{_lambda_.9} parent=0
    #allocation3 [shape = 'u8[65536]{0}', space=vmem, size = 0x10000, scoped, tag = 'output window, operand 0, single buffered']
    #allocation4 [shape = 's32[1]{0}', space=sflag, size = 0x4, scoped, tag = 'scoped memory for _lambda_.9']
    %8 = vsyncpa [#allocation4], 0
    // Predicated region
    $region2: #{_lambda_.9} parent=1 // pred_check
      _
    $region3: #{_lambda_.9} parent=1 // pred_check_branch
      %10 = sbr.rel (0) target = $region5
    $region4: #{_lambda_.9} parent=1 // pred_region
      _
    $region5: #{_lambda_.9} parent=1 // pred_fallthru
      _
    // Predicated region
    $region6: #{_lambda_.9} parent=1 // pred_check
      _
    $region7: #{_lambda_.9} parent=1 // pred_check_branch
      %12 = sbr.rel (0) target = $region9
    $region8: #{_lambda_.9} parent=1 // pred_region
      _
    $region9: #{_lambda_.9} parent=1 // pred_fallthru
      _
    // Predicated region
    $region10: #{_lambda_.9} parent=1 // pred_check
      _
    $region11: #{_lambda_.9} parent=1 // pred_check_branch
      %14 = sbr.rel (0) target = $region13
    $region12: #{_lambda_.9} parent=1 // pred_region
      _
    $region13: #{_lambda_.9} parent=1 // pred_fallthru
      _
    %p16 = scmp.eq.s32.totalorder 0, 0
    // Predicated region
    $region14: #{_lambda_.9} parent=1 // pred_check
      %p17 = pneg %p16
    $region15: #{_lambda_.9} parent=1 // pred_check_branch
      %19 = sbr.rel (%p17) target = $region17
    $region16: #{_lambda_.9} parent=1 // pred_region
      %20 = vst [vmem:[#allocation2] sm:$0xff] 0.0
      %21 = vst [vmem:[#allocation2 + $0x8] sm:$0xff] 0.0
      %22 = vst [vmem:[#allocation2 + $0x10] sm:$0xff] 0.0
      %23 = vst [vmem:[#allocation2 + $0x18] sm:$0xff] 0.0
      %24 = vst [vmem:[#allocation2 + $0x20] sm:$0xff] 0.0
      %25 = vst [vmem:[#allocation2 + $0x28] sm:$0xff] 0.0
      %26 = vst [vmem:[#allocation2 + $0x30] sm:$0xff] 0.0
      %27 = vst [vmem:[#allocation2 + $0x38] sm:$0xff] 0.0
      %28 = vst [vmem:[#allocation2 + $0x40] sm:$0xff] 0.0
      %29 = vst [vmem:[#allocation2 + $0x48] sm:$0xff] 0.0
      %30 = vst [vmem:[#allocation2 + $0x50] sm:$0xff] 0.0
      %31 = vst [vmem:[#allocation2 + $0x58] sm:$0xff] 0.0
      %32 = vst [vmem:[#allocation2 + $0x60] sm:$0xff] 0.0
      %33 = vst [vmem:[#allocation2 + $0x68] sm:$0xff] 0.0
      %34 = vst [vmem:[#allocation2 + $0x70] sm:$0xff] 0.0
      %35 = vst [vmem:[#allocation2 + $0x78] sm:$0xff] 0.0
    $region17: #{_lambda_.9} parent=1 // pred_fallthru
      _
    %v36 = vld [vmem:[#allocation2] sm:$0xff]
    %v37 = vld [vmem:[#allocation2 + $0x8] sm:$0xff]
    %v38 = vld [vmem:[#allocation2 + $0x10] sm:$0xff]
    %v39 = vld [vmem:[#allocation2 + $0x18] sm:$0xff]
    %v40 = vld [vmem:[#allocation2 + $0x20] sm:$0xff]
    %v41 = vld [vmem:[#allocation2 + $0x28] sm:$0xff]
    %v42 = vld [vmem:[#allocation2 + $0x30] sm:$0xff]
    %v43 = vld [vmem:[#allocation2 + $0x38] sm:$0xff]
    %v44 = vld [vmem:[#allocation2 + $0x40] sm:$0xff]
    %v45 = vld [vmem:[#allocation2 + $0x48] sm:$0xff]
    %v46 = vld [vmem:[#allocation2 + $0x50] sm:$0xff]
    %v47 = vld [vmem:[#allocation2 + $0x58] sm:$0xff]
    %v48 = vld [vmem:[#allocation2 + $0x60] sm:$0xff]
    %v49 = vld [vmem:[#allocation2 + $0x68] sm:$0xff]
    %v50 = vld [vmem:[#allocation2 + $0x70] sm:$0xff]
    %v51 = vld [vmem:[#allocation2 + $0x78] sm:$0xff]
    %v52 = vld [vmem:[%s0] sm:$0xff]
    %v53 = vld [vmem:[%s0 + $0x8] sm:$0xff]
    %v54 = vld [vmem:[%s0 + $0x10] sm:$0xff]
    %v55 = vld [vmem:[%s0 + $0x18] sm:$0xff]
    %v56 = vld [vmem:[%s0 + $0x20] sm:$0xff]
    %v57 = vld [vmem:[%s0 + $0x28] sm:$0xff]
    %v58 = vld [vmem:[%s0 + $0x30] sm:$0xff]
    %v59 = vld [vmem:[%s0 + $0x38] sm:$0xff]
    %v60 = vpack.c.bf16 %v53, %v52
    %v61 = vpack.c.bf16 %v55, %v54
    %v62 = vpack.c.bf16 %v57, %v56
    %v63 = vpack.c.bf16 %v59, %v58
    %v64 = vld [vmem:[%s1] sm:$0xff]
    %v65 = vld [vmem:[%s1 + $0x8] sm:$0xff]
    %v66 = vld [vmem:[%s1 + $0x10] sm:$0xff]
    %v67 = vld [vmem:[%s1 + $0x18] sm:$0xff]
    %v68 = vld [vmem:[%s1 + $0x20] sm:$0xff]
    %v69 = vld [vmem:[%s1 + $0x28] sm:$0xff]
    %v70 = vld [vmem:[%s1 + $0x30] sm:$0xff]
    %v71 = vld [vmem:[%s1 + $0x38] sm:$0xff]
    %v72 = vld [vmem:[%s1 + $0x40] sm:$0xff]
    %v73 = vld [vmem:[%s1 + $0x48] sm:$0xff]
    %v74 = vld [vmem:[%s1 + $0x50] sm:$0xff]
    %v75 = vld [vmem:[%s1 + $0x58] sm:$0xff]
    %v76 = vld [vmem:[%s1 + $0x60] sm:$0xff]
    %v77 = vld [vmem:[%s1 + $0x68] sm:$0xff]
    %v78 = vld [vmem:[%s1 + $0x70] sm:$0xff]
    %v79 = vld [vmem:[%s1 + $0x78] sm:$0xff]
    %v96 = vunpack.c.l.b16 %v64
    %v97 = vunpack.c.h.b16 %v64
    %v98 = vunpack.c.l.b16 %v65
    %v99 = vunpack.c.h.b16 %v65
    %v100 = vunpack.c.l.b16 %v66
    %v101 = vunpack.c.h.b16 %v66
    %v102 = vunpack.c.l.b16 %v67
    %v103 = vunpack.c.h.b16 %v67
    %v104 = vunpack.c.l.b16 %v68
    %v105 = vunpack.c.h.b16 %v68
    %v106 = vunpack.c.l.b16 %v69
    %v107 = vunpack.c.h.b16 %v69
    %v108 = vunpack.c.l.b16 %v70
    %v109 = vunpack.c.h.b16 %v70
    %v110 = vunpack.c.l.b16 %v71
    %v111 = vunpack.c.h.b16 %v71
    %v112 = vunpack.c.l.b16 %v72
    %v113 = vunpack.c.h.b16 %v72
    %v114 = vunpack.c.l.b16 %v73
    %v115 = vunpack.c.h.b16 %v73
    %v116 = vunpack.c.l.b16 %v74
    %v117 = vunpack.c.h.b16 %v74
    %v118 = vunpack.c.l.b16 %v75
    %v119 = vunpack.c.h.b16 %v75
    %v120 = vunpack.c.l.b16 %v76
    %v121 = vunpack.c.h.b16 %v76
    %v122 = vunpack.c.l.b16 %v77
    %v123 = vunpack.c.h.b16 %v77
    %v124 = vunpack.c.l.b16 %v78
    %v125 = vunpack.c.h.b16 %v78
    %v126 = vunpack.c.l.b16 %v79
    %v127 = vunpack.c.h.b16 %v79
    %v128 = vpack.c.b16 %v98, %v96
    %v129 = vpack.c.b16 %v99, %v97
    %v130 = vpack.c.b16 %v102, %v100
    %v131 = vpack.c.b16 %v103, %v101
    %v132 = vpack.c.b16 %v106, %v104
    %v133 = vpack.c.b16 %v107, %v105
    %v134 = vpack.c.b16 %v110, %v108
    %v135 = vpack.c.b16 %v111, %v109
    %v136 = vpack.c.b16 %v114, %v112
    %v137 = vpack.c.b16 %v115, %v113
    %v138 = vpack.c.b16 %v118, %v116
    %v139 = vpack.c.b16 %v119, %v117
    %v140 = vpack.c.b16 %v122, %v120
    %v141 = vpack.c.b16 %v123, %v121
    %v142 = vpack.c.b16 %v126, %v124
    %v143 = vpack.c.b16 %v127, %v125
    %160 = vmatprep.subr.bf16.mxu0 %v143
    %161 = vmatpush1.bf16.msra.mxu0 %v142
    %162 = vmatprep.subr.bf16.mxu0 %v141
    %163 = vmatpush1.bf16.msra.mxu0 %v140
    %164 = vmatprep.subr.bf16.mxu0 %v139
    %165 = vmatpush1.bf16.msra.mxu0 %v138
    %166 = vmatprep.subr.bf16.mxu0 %v137
    %167 = vmatpush1.bf16.msra.mxu0 %v136
    %168 = vmatprep.subr.bf16.mxu0 %v135
    %169 = vmatpush1.bf16.msra.mxu0 %v134
    %170 = vmatprep.subr.bf16.mxu0 %v133
    %171 = vmatpush1.bf16.msra.mxu0 %v132
    %172 = vmatprep.subr.bf16.mxu0 %v131
    %173 = vmatpush1.bf16.msra.mxu0 %v130
    %174 = vmatprep.subr.bf16.mxu0 %v129
    %175 = vmatpush1.bf16.msra.mxu0 %v128
    %176 = vmatprep.subr.bf16.mxu0 0
    %177 = vmatpush2.bf16.msra.mxu0 0
    %178 = vmatprep.subr.bf16.mxu0 0
    %179 = vmatpush2.bf16.msra.mxu0 0
    %180 = vmatprep.subr.bf16.mxu0 0
    %181 = vmatpush2.bf16.msra.mxu0 0
    %182 = vmatprep.subr.bf16.mxu0 0
    %183 = vmatpush2.bf16.msra.mxu0 0
    %184 = vmatprep.subr.bf16.mxu0 0
    %185 = vmatpush2.bf16.msra.mxu0 0
    %186 = vmatprep.subr.bf16.mxu0 0
    %187 = vmatpush2.bf16.msra.mxu0 0
    %188 = vmatprep.subr.bf16.mxu0 0
    %189 = vmatpush2.bf16.msra.mxu0 0
    %190 = vmatprep.subr.bf16.mxu0 0
    %191 = vmatpush2.bf16.msra.mxu0 0
    %192 = vmatprep.mubr.bf16.mxu0 0
    %193 = vmatmul.mubr.bf16.gmra.mxu0 %v60
    %v194 = vpop.f32.mrf.mxu0
    %v195 = vadd.f32 0.0, %v194
    %v196 = vpop.f32.mrf.mxu0
    %v197 = vadd.f32 0.0, %v196
    %v198 = vpop.f32.mrf.mxu0
    %v199 = vadd.f32 0.0, %v198
    %v200 = vpop.f32.mrf.mxu0
    %v201 = vadd.f32 0.0, %v200
    %202 = vmatprep.mubr.bf16.mxu0 0
    %203 = vmatmul.mubr.bf16.gmra.mxu0 %v61
    %v204 = vpop.f32.mrf.mxu0
    %v205 = vadd.f32 0.0, %v204
    %v206 = vpop.f32.mrf.mxu0
    %v207 = vadd.f32 0.0, %v206
    %v208 = vpop.f32.mrf.mxu0
    %v209 = vadd.f32 0.0, %v208
    %v210 = vpop.f32.mrf.mxu0
    %v211 = vadd.f32 0.0, %v210
    %212 = vmatprep.mubr.bf16.mxu0 0
    %213 = vmatmul.mubr.bf16.gmra.mxu0 %v62
    %v214 = vpop.f32.mrf.mxu0
    %v215 = vadd.f32 0.0, %v214
    %v216 = vpop.f32.mrf.mxu0
    %v217 = vadd.f32 0.0, %v216
    %v218 = vpop.f32.mrf.mxu0
    %v219 = vadd.f32 0.0, %v218
    %v220 = vpop.f32.mrf.mxu0
    %v221 = vadd.f32 0.0, %v220
    %222 = vmatprep.mubr.bf16.mxu0 0
    %223 = vmatmul.mubr.bf16.gmra.mxu0 %v63
    %v224 = vpop.f32.mrf.mxu0
    %v225 = vadd.f32 0.0, %v224
    %v226 = vpop.f32.mrf.mxu0
    %v227 = vadd.f32 0.0, %v226
    %v228 = vpop.f32.mrf.mxu0
    %v229 = vadd.f32 0.0, %v228
    %v230 = vpop.f32.mrf.mxu0
    %v231 = vadd.f32 0.0, %v230
    %232 = vdwg.mxu0
    %v233 = vadd.f32 %v36, %v195
    %v234 = vadd.f32 %v37, %v197
    %v235 = vadd.f32 %v38, %v199
    %v236 = vadd.f32 %v39, %v201
    %v237 = vadd.f32 %v40, %v205
    %v238 = vadd.f32 %v41, %v207
    %v239 = vadd.f32 %v42, %v209
    %v240 = vadd.f32 %v43, %v211
    %v241 = vadd.f32 %v44, %v215
    %v242 = vadd.f32 %v45, %v217
    %v243 = vadd.f32 %v46, %v219
    %v244 = vadd.f32 %v47, %v221
    %v245 = vadd.f32 %v48, %v225
    %v246 = vadd.f32 %v49, %v227
    %v247 = vadd.f32 %v50, %v229
    %v248 = vadd.f32 %v51, %v231
    %249 = vst [vmem:[#allocation2] sm:$0xff] %v233
    %250 = vst [vmem:[#allocation2 + $0x8] sm:$0xff] %v234
    %251 = vst [vmem:[#allocation2 + $0x10] sm:$0xff] %v235
    %252 = vst [vmem:[#allocation2 + $0x18] sm:$0xff] %v236
    %253 = vst [vmem:[#allocation2 + $0x20] sm:$0xff] %v237
    %254 = vst [vmem:[#allocation2 + $0x28] sm:$0xff] %v238
    %255 = vst [vmem:[#allocation2 + $0x30] sm:$0xff] %v239
    %256 = vst [vmem:[#allocation2 + $0x38] sm:$0xff] %v240
    %257 = vst [vmem:[#allocation2 + $0x40] sm:$0xff] %v241
    %258 = vst [vmem:[#allocation2 + $0x48] sm:$0xff] %v242
    %259 = vst [vmem:[#allocation2 + $0x50] sm:$0xff] %v243
    %260 = vst [vmem:[#allocation2 + $0x58] sm:$0xff] %v244
    %261 = vst [vmem:[#allocation2 + $0x60] sm:$0xff] %v245
    %262 = vst [vmem:[#allocation2 + $0x68] sm:$0xff] %v246
    %263 = vst [vmem:[#allocation2 + $0x70] sm:$0xff] %v247
    %264 = vst [vmem:[#allocation2 + $0x78] sm:$0xff] %v248
    // Predicated region
    $region18: #{_lambda_.9} parent=1 // pred_check
      %p265 = pneg %p16
    $region19: #{_lambda_.9} parent=1 // pred_check_branch
      %267 = sbr.rel (%p265) target = $region21
    $region20: #{_lambda_.9} parent=1 // pred_region
      %v268 = vld [vmem:[#allocation2] sm:$0xff]
      %v269 = vld [vmem:[#allocation2 + $0x8] sm:$0xff]
      %v270 = vld [vmem:[#allocation2 + $0x10] sm:$0xff]
      %v271 = vld [vmem:[#allocation2 + $0x18] sm:$0xff]
      %v272 = vld [vmem:[#allocation2 + $0x20] sm:$0xff]
      %v273 = vld [vmem:[#allocation2 + $0x28] sm:$0xff]
      %v274 = vld [vmem:[#allocation2 + $0x30] sm:$0xff]
      %v275 = vld [vmem:[#allocation2 + $0x38] sm:$0xff]
      %v276 = vld [vmem:[#allocation2 + $0x40] sm:$0xff]
      %v277 = vld [vmem:[#allocation2 + $0x48] sm:$0xff]
      %v278 = vld [vmem:[#allocation2 + $0x50] sm:$0xff]
      %v279 = vld [vmem:[#allocation2 + $0x58] sm:$0xff]
      %v280 = vld [vmem:[#allocation2 + $0x60] sm:$0xff]
      %v281 = vld [vmem:[#allocation2 + $0x68] sm:$0xff]
      %v282 = vld [vmem:[#allocation2 + $0x70] sm:$0xff]
      %v283 = vld [vmem:[#allocation2 + $0x78] sm:$0xff]
      %v284 = vld [vmem:[%s2] sm:$0x3]
      %v286 = vlaneseq
      %v287 = vshrl.u32 %v286, 7
      %v288 = vsub.s32 0, %v287
      %v289 = vrot.slane %v284, %v288
      %v290 = vlaneseq
      %v291 = vshrl.u32 %v290, 7
      %v292 = vsub.s32 1, %v291
      %v293 = vrot.slane %v284, %v292
      %v296 = vadd.f32 %v268, %v289
      %v297 = vadd.f32 %v269, %v293
      %v298 = vadd.f32 %v270, %v289
      %v299 = vadd.f32 %v271, %v293
      %v300 = vadd.f32 %v272, %v289
      %v301 = vadd.f32 %v273, %v293
      %v302 = vadd.f32 %v274, %v289
      %v303 = vadd.f32 %v275, %v293
      %v304 = vadd.f32 %v276, %v289
      %v305 = vadd.f32 %v277, %v293
      %v306 = vadd.f32 %v278, %v289
      %v307 = vadd.f32 %v279, %v293
      %v308 = vadd.f32 %v280, %v289
      %v309 = vadd.f32 %v281, %v293
      %v310 = vadd.f32 %v282, %v289
      %v311 = vadd.f32 %v283, %v293
      %312 = vst [vmem:[#allocation3] sm:$0xff] %v296
      %313 = vst [vmem:[#allocation3 + $0x8] sm:$0xff] %v297
      %314 = vst [vmem:[#allocation3 + $0x10] sm:$0xff] %v298
      %315 = vst [vmem:[#allocation3 + $0x18] sm:$0xff] %v299
      %316 = vst [vmem:[#allocation3 + $0x20] sm:$0xff] %v300
      %317 = vst [vmem:[#allocation3 + $0x28] sm:$0xff] %v301
      %318 = vst [vmem:[#allocation3 + $0x30] sm:$0xff] %v302
      %319 = vst [vmem:[#allocation3 + $0x38] sm:$0xff] %v303
      %320 = vst [vmem:[#allocation3 + $0x40] sm:$0xff] %v304
      %321 = vst [vmem:[#allocation3 + $0x48] sm:$0xff] %v305
      %322 = vst [vmem:[#allocation3 + $0x50] sm:$0xff] %v306
      %323 = vst [vmem:[#allocation3 + $0x58] sm:$0xff] %v307
      %324 = vst [vmem:[#allocation3 + $0x60] sm:$0xff] %v308
      %325 = vst [vmem:[#allocation3 + $0x68] sm:$0xff] %v309
      %326 = vst [vmem:[#allocation3 + $0x70] sm:$0xff] %v310
      %327 = vst [vmem:[#allocation3 + $0x78] sm:$0xff] %v311
    $region21: #{_lambda_.9} parent=1 // pred_fallthru
      _
    // Predicated region
    $region22: #{_lambda_.9} parent=1 // pred_check
      _
    $region23: #{_lambda_.9} parent=1 // pred_check_branch
      %329 = sbr.rel (0) target = $region25
    $region24: #{_lambda_.9} parent=1 // pred_region
      %s331 = ssub.s32 2048, 2048
      %332 = vsyncadd [#allocation4], %s331
      %s333 = sshll.u32 [#allocation3], 4
      %s334 = int_to_ptr.vmem [resolvable:$true] %s333
      %339 = dma.vmem_to_hbm [thread:$0]  %s334, 2048, %s3, [#allocation4], 256, 256, 16
    $region25: #{_lambda_.9} parent=1 // pred_fallthru
      _
    // Predicated region
    $region26: #{_lambda_.9} parent=1 // pred_check
      _
    $region27: #{_lambda_.9} parent=1 // pred_check_branch
      %341 = sbr.rel (0) target = $region29
    $region28: #{_lambda_.9} parent=1 // pred_region
      %342 = dma.done [#allocation4], 2048
    $region29: #{_lambda_.9} parent=1 // pred_fallthru
      _
    %343 = vsyncpa [#allocation4], 1

</llo_original>
